<compile_context>
chip_gen: v6e
topology: v6e:2x2x1
jax: 0.10.0
libtpu: 0.0.40
codegen_flags: <defaults>
</compile_context>

<pallas_src>
import typing

import jax
import jax.numpy as jnp
from jax.experimental import pallas as pl
from jax.experimental.pallas import tpu as pltpu


class Output(typing.NamedTuple):
    a: jax.Array
    x: jax.Array


def _ret_scalar_kernel(ret_ref, a_ref):
    # Both refs are SMEM f32[1]: a pure scalar copy on the scalar ALU.
    # With input_output_aliases={0: 0} the output HBM buffer IS the input
    # buffer; this store just keeps the output defined.
    a_ref[0] = ret_ref[0]


def _forward(x: jax.Array, ret_val) -> Output:
    # ret_val is a traced scalar inside jit (not a baked-in constant):
    # changing it does not trigger a Mosaic recompile and costs no extra
    # per-call transfer.
    ret_arr = jnp.asarray(ret_val, dtype=jnp.float32).reshape(1)

    a_out = pl.pallas_call(
        _ret_scalar_kernel,
        out_shape=jax.ShapeDtypeStruct((1,), jnp.float32),
        in_specs=[pl.BlockSpec(memory_space=pltpu.MemorySpace.SMEM)],
        out_specs=pl.BlockSpec(memory_space=pltpu.MemorySpace.SMEM),
        # Output aliases the input: no separate 4-byte output allocation or
        # writeback DMA for this scalar.
        input_output_aliases={0: 0},
    )(ret_arr)

    # reshape(()) is a free metadata change (vs. a_out[0], which would lower
    # to an extra dynamic-slice op around the custom call).
    a = a_out.reshape(())

    # The module's only tensor "compute" is an identity: return x unchanged,
    # avoiding any HBM read+write round trip (2x bytes at HBM bandwidth) for
    # zero semantic value.
    # TODO(synk): `a.requires_grad = True` is autograd metadata with no
    # Pallas/JAX-array equivalent; gradient tracking is handled by jax.grad
    # at the framework level, not in the kernel.
    return Output(a=a, x=x)


# Single jitted entry point; ret_val is traced, x is traced.
model_ret_namedtuple_forward = jax.jit(_forward)


if __name__ == "__main__":
    key = jax.random.PRNGKey(0)

    # Parameter self.w = nn.Parameter(torch.zeros(10)) — unused in forward,
    # kept only for shape fidelity with the original module.
    w = jnp.zeros((10,), dtype=jnp.float32)

    # Small NCHW example input consistent with the module's usage.
    x = jax.random.normal(key, (2, 4, 16, 16), dtype=jnp.float32)
    ret_val = 0.5

    out = model_ret_namedtuple_forward(x, ret_val)
    jax.block_until_ready(out)

    assert out.a.shape == () and out.a.dtype == jnp.float32
    assert float(out.a) == ret_val  # exact for 0.5 (representable in f32)
    assert out.x.shape == x.shape and out.x.dtype == x.dtype
    assert bool(jnp.all(out.x == x))

    print("KERNEL_OK")
</pallas_src>

<mosaic_0001>
module attributes {stable_mosaic.version = 11 : i64} {
  func.func @_ret_scalar_kernel(%arg0: memref<1xf32, #tpu.memory_space<smem>>, %arg1: memref<1xf32, #tpu.memory_space<smem>>) attributes {dimension_semantics = [], scalar_prefetch = 0 : i64, scratch_operands = 0 : i64, tpu.core_type = #tpu.core_type<tc>} {
    %c0 = arith.constant 0 : index
    %0 = memref.load %arg0[%c0] : memref<1xf32, #tpu.memory_space<smem>>
    %c0_0 = arith.constant 0 : index
    %1 = memref.load %arg1[%c0_0] : memref<1xf32, #tpu.memory_space<smem>>
    memref.store %0, %arg1[%c0_0] : memref<1xf32, #tpu.memory_space<smem>>
    return
  }
}

</mosaic_0001>

<llo_original>
// kernel: _forward.1
$region0: #{_forward.1}
  #allocation0 [shape = 'u32[]', space=smem, size = 0x4, offset = 0x4, fixed_abs, tag = 'smem constant byte address 0x4 - core index']
  #allocation1 [shape = 'u32[144,128]{1,0:T(1,128)}', space=vmem, size = 0x12000, scoped, tag = 'internal scratch']
  #allocation2 [shape = 'f32[1]{0:T(128)S(6)}', space=smem, size = 0x200, scoped, tag = 'scoped memory for _forward.1']
  %s0 = inlined_call_operand.<no memory space> [shape: f32[1], index: 0, kind: input, shape index: {}, may-alias: {0,1}]
  %s1 = inlined_call_operand.hbm [shape: f32[1], index: 1, kind: output, shape index: {}, may-alias: {0,1}]
  %s2 = sld [smem:[#allocation0]]
  $region14: #{_forward.1} parent=0
    _
  %s4 = ssub.s32 1, %s2
  %s5 = scalar_select 0, %s4, %s2
  %6 = sst [smem:[#allocation2]] %s0
  $region1: #{_forward.1} parent=0
    #allocation3 [shape = 'u8[512]{0}', space=smem, size = 0x200, scoped, tag = 'output window, operand 0, single buffered']
    #allocation4 [shape = 's32[1]{0}', space=sflag, size = 0x4, scoped, tag = 'scoped memory for _forward.1']
    %7 = vsyncpa [#allocation4], 0
    // Predicated region
    $region2: #{_forward.1} parent=1 // pred_check
      _
    $region3: #{_forward.1} parent=1 // pred_check_branch
      %9 = sbr.rel (0) target = $region5
    $region4: #{_forward.1} parent=1 // pred_region
      _
    $region5: #{_forward.1} parent=1 // pred_fallthru
      _
    %s10 = sld [smem:[#allocation2]]
    %s11 = scalar_lea.smem [#allocation3], 0
    %12 = sst [smem:[%s11]] %s10
    // Predicated region
    $region6: #{_forward.1} parent=1 // pred_check
      _
    $region7: #{_forward.1} parent=1 // pred_check_branch
      %14 = sbr.rel (0) target = $region9
    $region8: #{_forward.1} parent=1 // pred_region
      %s16 = ssub.s32 16, 16
      %17 = vsyncadd [#allocation4], %s16
      %20 = dma.smem_to_hbm [#allocation3], 16, %s1, [#allocation4]
    $region9: #{_forward.1} parent=1 // pred_fallthru
      _
    // Predicated region
    $region10: #{_forward.1} parent=1 // pred_check
      _
    $region11: #{_forward.1} parent=1 // pred_check_branch
      %22 = sbr.rel (0) target = $region13
    $region12: #{_forward.1} parent=1 // pred_region
      %23 = dma.done [#allocation4], 16
    $region13: #{_forward.1} parent=1 // pred_fallthru
      _
    %24 = sfence
    %25 = vsyncpa [#allocation4], 1

</llo_original>
